<compile_context>
chip_gen: v5e
topology: v5e:2x2
jax: 0.10.0
libtpu: 0.0.40
codegen_flags: <defaults>
</compile_context>

<pallas_src>
import jax
import jax.numpy as jnp
from jax.experimental import pallas as pl
from jax.experimental.pallas import tpu as pltpu


def _embedding_net_kernel(x_ref, w1_ref, b1_ref, w2_ref, b2_ref, out_ref):
    # Layer 1: Linear(input_dim -> 64) + ReLU  (MXU matmul, f32 accumulation)
    h = jnp.dot(x_ref[...], w1_ref[...], preferred_element_type=jnp.float32)
    h = jnp.maximum(h + b1_ref[...], 0.0)          # bias broadcast + ReLU on the VPU
    # Layer 2: Linear(64 -> embedding_dim)
    y = jnp.dot(h, w2_ref[...], preferred_element_type=jnp.float32)
    out_ref[...] = (y + b2_ref[...]).astype(out_ref.dtype)


def embedding_net_forward(x, w1, b1, w2, b2, *, tile_m=4096, gridless_rows=16384):
    """Fused MLP forward. x: (B, input_dim) f32 -> (B, embedding_dim) f32.

    B <= gridless_rows: single gridless pallas_call, everything resident in VMEM
    (no grid/pipeline machinery — compute is negligible, time is pure DMA).
    B  > gridless_rows: batch tiled along a "parallel" grid axis with a cdiv grid
    (no host padding/slicing); weights stay VMEM-resident (constant block index)
    while x/out tiles are pipelined.
    """
    B, in_dim = x.shape
    hid = w1.shape[1]
    emb = w2.shape[1]

    if B <= gridless_rows:
        # Gridless path: no grid, no pipeline prologue — whole problem is one VMEM block.
        return pl.pallas_call(
            _embedding_net_kernel,
            out_shape=jax.ShapeDtypeStruct((B, emb), jnp.float32),
            compiler_params=pltpu.CompilerParams(vmem_limit_bytes=48 * 1024 * 1024),
        )(x, w1, b1, w2, b2)

    # Batched path: cdiv grid, ragged trailing block handled by Pallas masking
    # (OOB input rows only produce OOB output rows, which are dropped on write).
    # gridless_rows > tile_m guarantees >= 2 grid steps here (v7x 2-TC sharding).
    grid_m = pl.cdiv(B, tile_m)
    return pl.pallas_call(
        _embedding_net_kernel,
        out_shape=jax.ShapeDtypeStruct((B, emb), jnp.float32),
        grid_spec=pl.GridSpec(
            grid=(grid_m,),
            in_specs=[
                # x: one (tile_m, in_dim) tile per grid step (in_dim block = full dim).
                pl.BlockSpec((tile_m, in_dim), lambda i: (i, 0)),
                # Weights/biases: constant block index -> DMA'd once, VMEM-resident.
                pl.BlockSpec((in_dim, hid), lambda i: (0, 0)),
                pl.BlockSpec((1, hid), lambda i: (0, 0)),
                pl.BlockSpec((hid, emb), lambda i: (0, 0)),
                pl.BlockSpec((1, emb), lambda i: (0, 0)),
            ],
            # emb=32 output kept as-is: lane-padding to 128 would 4x HBM write bytes
            # on a DMA-bound kernel.  Revisit only if a bundle dump shows vst-slot
            # saturation (then present a lane-dense (B/4, 128) slab wrapper-side).
            out_specs=pl.BlockSpec((tile_m, emb), lambda i: (i, 0)),
        ),
        compiler_params=pltpu.CompilerParams(
            # Batch axis is independent -> parallel (shards across v7x's 2 TCs).
            dimension_semantics=("parallel",),
            vmem_limit_bytes=48 * 1024 * 1024,
        ),
    )(x, w1, b1, w2, b2)


def init_params(key, input_dim, hidden_dim, embedding_dim):
    """Deterministic init mirroring nn.Linear shapes (stored as (in, out))."""
    k1, k2, k3, k4 = jax.random.split(key, 4)
    # PyTorch default init: U(-1/sqrt(fan_in), 1/sqrt(fan_in))
    s1 = 1.0 / jnp.sqrt(input_dim)
    s2 = 1.0 / jnp.sqrt(hidden_dim)
    w1 = jax.random.uniform(k1, (input_dim, hidden_dim), jnp.float32, -s1, s1)
    b1 = jax.random.uniform(k2, (1, hidden_dim), jnp.float32, -s1, s1)
    w2 = jax.random.uniform(k3, (hidden_dim, embedding_dim), jnp.float32, -s2, s2)
    b2 = jax.random.uniform(k4, (1, embedding_dim), jnp.float32, -s2, s2)
    return w1, b1, w2, b2


def _reference(x, w1, b1, w2, b2):
    return jnp.maximum(x @ w1 + b1, 0.0) @ w2 + b2


if __name__ == "__main__":
    input_dim = 27
    hidden_dim = 64
    embedding_dim = 32

    key = jax.random.PRNGKey(0)
    kx1, kx2, kp = jax.random.split(key, 3)
    w1, b1, w2, b2 = init_params(kp, input_dim, hidden_dim, embedding_dim)

    # Small-batch (gridless) path — matches the tiny module usage.
    batch = 8
    x_small = jax.random.normal(kx1, (batch, input_dim), jnp.float32)
    out_small = jax.block_until_ready(embedding_net_forward(x_small, w1, b1, w2, b2))
    ref_small = _reference(x_small, w1, b1, w2, b2)
    assert out_small.shape == (batch, embedding_dim)
    assert jnp.allclose(out_small, ref_small, atol=1e-5, rtol=1e-5)

    # Batched (cdiv-grid, parallel-axis) path — small tile / threshold overrides so the
    # test stays small while still exercising the ragged trailing block (300 % 128 != 0).
    big_batch = 300
    x_big = jax.random.normal(kx2, (big_batch, input_dim), jnp.float32)
    out_big = jax.block_until_ready(
        embedding_net_forward(x_big, w1, b1, w2, b2, tile_m=128, gridless_rows=128)
    )
    ref_big = _reference(x_big, w1, b1, w2, b2)
    assert out_big.shape == (big_batch, embedding_dim)
    assert jnp.allclose(out_big, ref_big, atol=1e-5, rtol=1e-5)

    print("KERNEL_OK")
</pallas_src>

<mosaic_0001>
module attributes {stable_mosaic.version = 11 : i64} {
  func.func @_embedding_net_kernel(%arg0: memref<8x27xf32, #tpu.memory_space<vmem>>, %arg1: memref<27x64xf32, #tpu.memory_space<vmem>>, %arg2: memref<1x64xf32, #tpu.memory_space<vmem>>, %arg3: memref<64x32xf32, #tpu.memory_space<vmem>>, %arg4: memref<1x32xf32, #tpu.memory_space<vmem>>, %arg5: memref<8x32xf32, #tpu.memory_space<vmem>>) attributes {dimension_semantics = [], scalar_prefetch = 0 : i64, scratch_operands = 0 : i64, tpu.core_type = #tpu.core_type<tc>} {
    %c0 = arith.constant 0 : index
    %c0_0 = arith.constant 0 : index
    %0 = vector.load %arg0[%c0, %c0_0] : memref<8x27xf32, #tpu.memory_space<vmem>>, vector<8x27xf32>
    %c0_1 = arith.constant 0 : index
    %c0_2 = arith.constant 0 : index
    %1 = vector.load %arg1[%c0_1, %c0_2] : memref<27x64xf32, #tpu.memory_space<vmem>>, vector<27x64xf32>
    %cst = arith.constant dense<0.000000e+00> : vector<8x64xf32>
    %2 = tpu.matmul %0, %1, %cst {dimension_numbers = #tpu.dot_dimension_numbers<[1], [0], [0], [1], [0, 0, 1, 1], [], []>} : vector<8x27xf32>, vector<27x64xf32>, vector<8x64xf32> -> vector<8x64xf32>
    %c0_3 = arith.constant 0 : index
    %c0_4 = arith.constant 0 : index
    %3 = vector.load %arg2[%c0_3, %c0_4] : memref<1x64xf32, #tpu.memory_space<vmem>>, vector<1x64xf32>
    %4 = vector.broadcast %3 : vector<1x64xf32> to vector<8x64xf32>
    %5 = arith.addf %2, %4 : vector<8x64xf32>
    %cst_5 = arith.constant 0.000000e+00 : f32
    %6 = vector.broadcast %cst_5 : f32 to vector<8x64xf32>
    %7 = arith.maximumf %5, %6 : vector<8x64xf32>
    %c0_6 = arith.constant 0 : index
    %c0_7 = arith.constant 0 : index
    %8 = vector.load %arg3[%c0_6, %c0_7] : memref<64x32xf32, #tpu.memory_space<vmem>>, vector<64x32xf32>
    %cst_8 = arith.constant dense<0.000000e+00> : vector<8x32xf32>
    %9 = tpu.matmul %7, %8, %cst_8 {dimension_numbers = #tpu.dot_dimension_numbers<[1], [0], [0], [1], [0, 0, 1, 1], [], []>} : vector<8x64xf32>, vector<64x32xf32>, vector<8x32xf32> -> vector<8x32xf32>
    %c0_9 = arith.constant 0 : index
    %c0_10 = arith.constant 0 : index
    %10 = vector.load %arg4[%c0_9, %c0_10] : memref<1x32xf32, #tpu.memory_space<vmem>>, vector<1x32xf32>
    %11 = vector.broadcast %10 : vector<1x32xf32> to vector<8x32xf32>
    %12 = arith.addf %9, %11 : vector<8x32xf32>
    %c0_11 = arith.constant 0 : index
    %c0_12 = arith.constant 0 : index
    %13 = vector.load %arg5[%c0_11, %c0_12] : memref<8x32xf32, #tpu.memory_space<vmem>>, vector<8x32xf32>
    tpu.vector_store %arg5[%c0_11, %c0_12], %12 {strides = array<i32>} : memref<8x32xf32, #tpu.memory_space<vmem>>, vector<8x32xf32>,
    return
  }
}

</mosaic_0001>

<llo_original>
// kernel: tpu_custom_call.1
$region0: #{tpu_custom_call.1}
  #allocation0 [shape = 'u32[]', space=smem, size = 0x4, offset = 0x4, fixed_abs, tag = 'smem constant byte address 0x4 - core index']
  #allocation1 [shape = 'u32[72,128]{1,0:T(1,128)}', space=vmem, size = 0x9000, scoped, tag = 'internal scratch']
  %s0 = inlined_call_operand.vmem [shape: f32[8,27], index: 0, kind: input, shape index: {}]
  %s1 = inlined_call_operand.vmem [shape: f32[27,64], index: 1, kind: input, shape index: {}]
  %s2 = inlined_call_operand.vmem [shape: f32[1,64], index: 2, kind: input, shape index: {}]
  %s3 = inlined_call_operand.vmem [shape: f32[64,32], index: 3, kind: input, shape index: {}]
  %s4 = inlined_call_operand.vmem [shape: f32[1,32], index: 4, kind: input, shape index: {}]
  %s5 = inlined_call_operand.hbm [shape: f32[8,32], index: 5, kind: output, shape index: {}]
  %s6 = sld [smem:[#allocation0]]
  $region30: #{tpu_custom_call.1} parent=0
    _
  %s8 = ssub.s32 1, %s6
  %s9 = scalar_select 0, %s8, %s6
  $region1: #{tpu_custom_call.1} parent=0
    #allocation2 [shape = 'u8[4096]{0}', space=vmem, size = 0x1000, scoped, tag = 'output window, operand 0, single buffered']
    #allocation3 [shape = 's32[1]{0}', space=sflag, size = 0x4, scoped, tag = 'scoped memory for tpu_custom_call.1']
    %10 = vsyncpa [#allocation3], 0
    // Predicated region
    $region2: #{tpu_custom_call.1} parent=1 // pred_check
      _
    $region3: #{tpu_custom_call.1} parent=1 // pred_check_branch
      %12 = sbr.rel (0) target = $region5
    $region4: #{tpu_custom_call.1} parent=1 // pred_region
      _
    $region5: #{tpu_custom_call.1} parent=1 // pred_fallthru
      _
    // Predicated region
    $region6: #{tpu_custom_call.1} parent=1 // pred_check
      _
    $region7: #{tpu_custom_call.1} parent=1 // pred_check_branch
      %14 = sbr.rel (0) target = $region9
    $region8: #{tpu_custom_call.1} parent=1 // pred_region
      _
    $region9: #{tpu_custom_call.1} parent=1 // pred_fallthru
      _
    // Predicated region
    $region10: #{tpu_custom_call.1} parent=1 // pred_check
      _
    $region11: #{tpu_custom_call.1} parent=1 // pred_check_branch
      %16 = sbr.rel (0) target = $region13
    $region12: #{tpu_custom_call.1} parent=1 // pred_region
      _
    $region13: #{tpu_custom_call.1} parent=1 // pred_fallthru
      _
    // Predicated region
    $region14: #{tpu_custom_call.1} parent=1 // pred_check
      _
    $region15: #{tpu_custom_call.1} parent=1 // pred_check_branch
      %18 = sbr.rel (0) target = $region17
    $region16: #{tpu_custom_call.1} parent=1 // pred_region
      _
    $region17: #{tpu_custom_call.1} parent=1 // pred_fallthru
      _
    // Predicated region
    $region18: #{tpu_custom_call.1} parent=1 // pred_check
      _
    $region19: #{tpu_custom_call.1} parent=1 // pred_check_branch
      %20 = sbr.rel (0) target = $region21
    $region20: #{tpu_custom_call.1} parent=1 // pred_region
      _
    $region21: #{tpu_custom_call.1} parent=1 // pred_fallthru
      _
    %v21 = vld [vmem:[%s0] sm:$0xff]
    %v22 = vld [vmem:[%s1] sm:$0xff]
    %v23 = vld [vmem:[%s1 + $0x8] sm:$0xff]
    %v24 = vld [vmem:[%s1 + $0x10] sm:$0xff]
    %v25 = vld [vmem:[%s1 + $0x18] sm:$0x7]
    %v26 = vld [vmem:[%s2] sm:$0x1]
    %v28 = vperm.slane %v26, 0
    %vm30 = vcmask 220160
    %v32 = vsel %vm30, %v21, 0
    %vm34 = vcmask 1042432
    %v36 = vsel %vm34, %v25, 0
    %38 = vmatpush.msra.mxu0 0.0
    %39 = vmatpush.msra.mxu0 0.0
    %40 = vmatpush.msra.mxu0 0.0
    %41 = vmatpush.msra.mxu0 0.0
    %42 = vmatpush.msra.mxu0 0.0
    %43 = vmatpush.msra.mxu0 0.0
    %44 = vmatpush.msra.mxu0 0.0
    %45 = vmatpush.msra.mxu0 0.0
    %46 = vmatpush.msra.mxu0 0.0
    %47 = vmatpush.msra.mxu0 0.0
    %48 = vmatpush.msra.mxu0 0.0
    %49 = vmatpush.msra.mxu0 0.0
    %50 = vmatpush.msra.mxu0 %v36
    %51 = vmatpush.msra.mxu0 %v24
    %52 = vmatpush.msra.mxu0 %v23
    %53 = vmatpush.msra.mxu0 %v22
    %54 = vmatmul.f32.gmra.mxu0 %v32
    %v55 = vpop.f32.mrf.mxu0
    %v56 = vadd.f32 %v28, %v55
    %57 = vdwg.mxu0
    %v58 = vmax.f32 %v56, 0.0
    %v59 = vld [vmem:[%s3] sm:$0xff]
    %v60 = vld [vmem:[%s3 + $0x8] sm:$0xff]
    %v61 = vld [vmem:[%s3 + $0x10] sm:$0xff]
    %v62 = vld [vmem:[%s3 + $0x18] sm:$0xff]
    %v63 = vld [vmem:[%s3 + $0x20] sm:$0xff]
    %v64 = vld [vmem:[%s3 + $0x28] sm:$0xff]
    %v65 = vld [vmem:[%s3 + $0x30] sm:$0xff]
    %v66 = vld [vmem:[%s3 + $0x38] sm:$0xff]
    %v67 = vld [vmem:[%s4] sm:$0x1]
    %v69 = vperm.slane %v67, 0
    %vm71 = vcmask 523264
    %v73 = vsel %vm71, %v58, 0
    %75 = vmatpush.msra.mxu0 0.0
    %76 = vmatpush.msra.mxu0 0.0
    %77 = vmatpush.msra.mxu0 0.0
    %78 = vmatpush.msra.mxu0 0.0
    %79 = vmatpush.msra.mxu0 0.0
    %80 = vmatpush.msra.mxu0 0.0
    %81 = vmatpush.msra.mxu0 0.0
    %82 = vmatpush.msra.mxu0 0.0
    %83 = vmatpush.msra.mxu0 %v66
    %84 = vmatpush.msra.mxu0 %v65
    %85 = vmatpush.msra.mxu0 %v64
    %86 = vmatpush.msra.mxu0 %v63
    %87 = vmatpush.msra.mxu0 %v62
    %88 = vmatpush.msra.mxu0 %v61
    %89 = vmatpush.msra.mxu0 %v60
    %90 = vmatpush.msra.mxu0 %v59
    %91 = vmatmul.f32.gmra.mxu0 %v73
    %v92 = vpop.f32.mrf.mxu0
    %v93 = vadd.f32 %v69, %v92
    %94 = vdwg.mxu0
    %vm95 = vcmask 261120
    %96 = vst.msk [vmem:[#allocation2] sm:$0xff] %vm95, %v93
    // Predicated region
    $region22: #{tpu_custom_call.1} parent=1 // pred_check
      _
    $region23: #{tpu_custom_call.1} parent=1 // pred_check_branch
      %98 = sbr.rel (0) target = $region25
    $region24: #{tpu_custom_call.1} parent=1 // pred_region
      %100 = vsyncadd [#allocation3], 0
      %s102 = sshll.u32 [#allocation2], 4
      %s103 = int_to_ptr.vmem [resolvable:$true] %s102
      %s104 = sshll.u32 %s5, 4
      %s105 = int_to_ptr.hbm [resolvable:$true] %s104
      %107 = dma.vmem_to_hbm [thread:$0]  %s103, 128, %s105, [#allocation3]
    $region25: #{tpu_custom_call.1} parent=1 // pred_fallthru
      _
    // Predicated region
    $region26: #{tpu_custom_call.1} parent=1 // pred_check
      _
    $region27: #{tpu_custom_call.1} parent=1 // pred_check_branch
      %109 = sbr.rel (0) target = $region29
    $region28: #{tpu_custom_call.1} parent=1 // pred_region
      %111 = dma.done [#allocation3], 128
    $region29: #{tpu_custom_call.1} parent=1 // pred_fallthru
      _
    %112 = vsyncpa [#allocation3], 1

</llo_original>
